<compile_context>
chip_gen: v7x
topology: tpu7x:2x2x1
jax: 0.10.0
libtpu: 0.0.40
codegen_flags: <defaults>
</compile_context>

<pallas_src>
import functools
import math

import jax
import jax.numpy as jnp
from jax.experimental import pallas as pl
from jax.experimental.pallas import tpu as pltpu


# ---------------------------------------------------------------------------
# helpers
# ---------------------------------------------------------------------------

_NN_TILE = 256      # tile for N x N adjacency / similarity streams (v7x-safe)
_ROW_TILE = 512     # tile for row-parallel (N, D) kernels


def _tile(n, pref):
    """Largest tile <= pref that divides n (falls back to the full extent)."""
    if n <= pref:
        return n
    t = pref
    while t >= 8:
        if n % t == 0:
            return t
        t //= 2
    return n


def _cparams(sem):
    return pltpu.CompilerParams(dimension_semantics=sem)


def _elu(x):
    # exp only sees the clamped-negative branch (safe values + safe grads)
    return jnp.where(x > 0, x, jnp.exp(jnp.minimum(x, 0.0)) - 1.0)


# ---------------------------------------------------------------------------
# Pallas kernels
# ---------------------------------------------------------------------------

def _linear_act_kernel(x_ref, w_ref, b_ref, o_ref, *, act):
    y = jnp.dot(x_ref[...], w_ref[...], preferred_element_type=jnp.float32)
    y = y + b_ref[...]
    if act == "elu":
        y = _elu(y)
    elif act == "tanh":
        y = jnp.tanh(y)
    o_ref[...] = y


def linear_act(x, w, b, act="none"):
    """act(x @ w + b), row-tiled (weights are tiny and stay resident)."""
    n, d_in = x.shape
    d_out = w.shape[1]
    tm = _tile(n, _ROW_TILE)
    return pl.pallas_call(
        functools.partial(_linear_act_kernel, act=act),
        out_shape=jax.ShapeDtypeStruct((n, d_out), jnp.float32),
        grid=(n // tm,),
        in_specs=[
            pl.BlockSpec((tm, d_in), lambda i: (i, 0)),
            pl.BlockSpec((d_in, d_out), lambda i: (0, 0)),
            pl.BlockSpec((1, d_out), lambda i: (0, 0)),
        ],
        out_specs=pl.BlockSpec((tm, d_out), lambda i: (i, 0)),
        compiler_params=_cparams(("parallel",)),
    )(x, w, b.reshape(1, -1))


def _proj_kernel(x_ref, w1_ref, b1_ref, w2_ref, b2_ref, o_ref):
    # fused projection head: (elu(x @ w1 + b1)) @ w2 + b2  -> one HBM round trip
    h = jnp.dot(x_ref[...], w1_ref[...], preferred_element_type=jnp.float32)
    h = _elu(h + b1_ref[...])
    o_ref[...] = jnp.dot(h, w2_ref[...],
                         preferred_element_type=jnp.float32) + b2_ref[...]


def proj_head(x, w1, b1, w2, b2):
    n, d = x.shape
    d_mid = w1.shape[1]
    d_out = w2.shape[1]
    tm = _tile(n, _ROW_TILE)
    return pl.pallas_call(
        _proj_kernel,
        out_shape=jax.ShapeDtypeStruct((n, d_out), jnp.float32),
        grid=(n // tm,),
        in_specs=[
            pl.BlockSpec((tm, d), lambda i: (i, 0)),
            pl.BlockSpec((d, d_mid), lambda i: (0, 0)),
            pl.BlockSpec((1, d_mid), lambda i: (0, 0)),
            pl.BlockSpec((d_mid, d_out), lambda i: (0, 0)),
            pl.BlockSpec((1, d_out), lambda i: (0, 0)),
        ],
        out_specs=pl.BlockSpec((tm, d_out), lambda i: (i, 0)),
        compiler_params=_cparams(("parallel",)),
    )(x, w1, b1.reshape(1, -1), w2, b2.reshape(1, -1))


def _gcn_kernel(adj_ref, h_ref, w_ref, b_ref, o_ref, acc_ref, *, alpha):
    k = pl.program_id(1)

    @pl.when(k == 0)
    def _():
        acc_ref[...] = jnp.zeros_like(acc_ref)

    hf = jnp.dot(h_ref[...], w_ref[...], preferred_element_type=jnp.float32)
    acc_ref[...] += jnp.dot(adj_ref[...], hf.astype(jnp.bfloat16),
                            preferred_element_type=jnp.float32)

    @pl.when(k == pl.num_programs(1) - 1)
    def _():
        agg = acc_ref[...] + b_ref[...]
        o_ref[...] = jnp.where(agg > 0, agg, alpha * agg)          # PReLU(0.25)


def gcn(adj_bf16, h, w, b, alpha=0.25):
    """PReLU(adj @ (h @ w) + b), tiled over (rows, reduction) of the adjacency."""
    n = adj_bf16.shape[0]
    d_in, d = w.shape
    tm = _tile(n, _NN_TILE)
    tk = _tile(n, _NN_TILE)
    return pl.pallas_call(
        functools.partial(_gcn_kernel, alpha=alpha),
        out_shape=jax.ShapeDtypeStruct((n, d), jnp.float32),
        grid=(n // tm, n // tk),
        in_specs=[
            pl.BlockSpec((tm, tk), lambda i, k: (i, k)),
            pl.BlockSpec((tk, d_in), lambda i, k: (k, 0)),
            pl.BlockSpec((d_in, d), lambda i, k: (0, 0)),
            pl.BlockSpec((1, d), lambda i, k: (0, 0)),
        ],
        out_specs=pl.BlockSpec((tm, d), lambda i, k: (i, 0)),
        scratch_shapes=[pltpu.VMEM((tm, d), jnp.float32)],
        compiler_params=_cparams(("parallel", "arbitrary")),
    )(adj_bf16, h, w, b.reshape(1, -1))


def _propagate_kernel(a_ref, x_ref, o_ref, acc_ref):
    k = pl.program_id(1)

    @pl.when(k == 0)
    def _():
        acc_ref[...] = jnp.zeros_like(acc_ref)

    acc_ref[...] += jnp.dot(a_ref[...], x_ref[...].astype(jnp.bfloat16),
                            preferred_element_type=jnp.float32)

    @pl.when(k == pl.num_programs(1) - 1)
    def _():
        o_ref[...] = acc_ref[...]


def propagate(adj_bf16, x):
    """Tiled adj @ x (bf16 stream, f32 accumulate)."""
    n = adj_bf16.shape[0]
    d = x.shape[1]
    tm = _tile(n, _NN_TILE)
    tk = _tile(n, _NN_TILE)
    return pl.pallas_call(
        _propagate_kernel,
        out_shape=jax.ShapeDtypeStruct((n, d), jnp.float32),
        grid=(n // tm, n // tk),
        in_specs=[
            pl.BlockSpec((tm, tk), lambda i, k: (i, k)),
            pl.BlockSpec((tk, d), lambda i, k: (k, 0)),
        ],
        out_specs=pl.BlockSpec((tm, d), lambda i, k: (i, 0)),
        scratch_shapes=[pltpu.VMEM((tm, d), jnp.float32)],
        compiler_params=_cparams(("parallel", "arbitrary")),
    )(adj_bf16, x)


def _sm_first_kernel(*refs, n_mp):
    # fused: adj_sm = mean(mps) (emitted as bf16 side output) + first propagation
    adj_refs = refs[:n_mp]
    z_ref = refs[n_mp]
    oz_ref = refs[n_mp + 1]
    oadj_ref = refs[n_mp + 2]
    acc_ref = refs[n_mp + 3]
    k = pl.program_id(1)

    adj = adj_refs[0][...].astype(jnp.float32)
    for r in adj_refs[1:]:
        adj = adj + r[...].astype(jnp.float32)
    adj_b = (adj * (1.0 / n_mp)).astype(jnp.bfloat16)
    oadj_ref[...] = adj_b

    @pl.when(k == 0)
    def _():
        acc_ref[...] = jnp.zeros_like(acc_ref)

    acc_ref[...] += jnp.dot(adj_b, z_ref[...].astype(jnp.bfloat16),
                            preferred_element_type=jnp.float32)

    @pl.when(k == pl.num_programs(1) - 1)
    def _():
        oz_ref[...] = acc_ref[...]


def sm_first_layer(mps_bf16, z):
    n = mps_bf16[0].shape[0]
    d = z.shape[1]
    n_mp = len(mps_bf16)
    tm = _tile(n, _NN_TILE)
    tk = _tile(n, _NN_TILE)
    adj_spec = pl.BlockSpec((tm, tk), lambda i, k: (i, k))
    z_new, adj_sm = pl.pallas_call(
        functools.partial(_sm_first_kernel, n_mp=n_mp),
        out_shape=(jax.ShapeDtypeStruct((n, d), jnp.float32),
                   jax.ShapeDtypeStruct((n, n), jnp.bfloat16)),
        grid=(n // tm, n // tk),
        in_specs=[adj_spec] * n_mp + [pl.BlockSpec((tk, d), lambda i, k: (k, 0))],
        out_specs=(pl.BlockSpec((tm, d), lambda i, k: (i, 0)),
                   pl.BlockSpec((tm, tk), lambda i, k: (i, k))),
        scratch_shapes=[pltpu.VMEM((tm, d), jnp.float32)],
        compiler_params=_cparams(("parallel", "arbitrary")),
    )(*mps_bf16, z)
    return z_new, adj_sm


def _intra_att_kernel(nei_ref, href_ref, attl_ref, attr_ref, o_ref, *, S):
    # nei_ref: (tm, S, D) gathered neighbor embeddings, href_ref: (tm, D)
    href = href_ref[...]
    nei = nei_ref[...]
    attl = attl_ref[...]                                           # (1, D)
    attr = attr_ref[...]                                           # (1, D)
    base = jnp.sum(href * attl, axis=1, keepdims=True)             # (tm, 1)
    sc = jnp.sum(nei * attr.reshape(1, 1, -1), axis=-1) + base     # (tm, S)
    sc = jnp.where(sc >= 0, sc, 0.01 * sc)                         # LeakyReLU(0.01)
    sc = sc - jnp.max(sc, axis=1, keepdims=True)
    e = jnp.exp(sc)
    a = e / jnp.sum(e, axis=1, keepdims=True)                      # softmax over S
    out = a[:, 0:1] * nei[:, 0, :]
    for s in range(1, S):                                          # S tiny & static
        out = out + a[:, s:s + 1] * nei[:, s, :]
    o_ref[...] = _elu(out)


def intra_att(nei_nsd, h_ref_nodes, att_vec):
    """GAT-style intra-type neighbor aggregation (HeCo intra_att) + ELU."""
    n, S, d = nei_nsd.shape
    attl = att_vec[:, :d]
    attr = att_vec[:, d:]
    tm = _tile(n, _ROW_TILE)
    return pl.pallas_call(
        functools.partial(_intra_att_kernel, S=S),
        out_shape=jax.ShapeDtypeStruct((n, d), jnp.float32),
        grid=(n // tm,),
        in_specs=[
            pl.BlockSpec((tm, S, d), lambda i: (i, 0, 0)),
            pl.BlockSpec((tm, d), lambda i: (i, 0)),
            pl.BlockSpec((1, d), lambda i: (0, 0)),
            pl.BlockSpec((1, d), lambda i: (0, 0)),
        ],
        out_specs=pl.BlockSpec((tm, d), lambda i: (i, 0)),
        compiler_params=_cparams(("parallel",)),
    )(nei_nsd, h_ref_nodes, attl, attr)


def _contranorm_kernel(xr_ref, xc_ref, o_ref, l_ref, acc_ref, *, scale, temp):
    k = pl.program_id(1)

    @pl.when(k == 0)
    def _():
        l_ref[...] = jnp.zeros_like(l_ref)
        acc_ref[...] = jnp.zeros_like(acc_ref)

    xr = xr_ref[...]
    xc = xc_ref[...]
    xrn = xr * jax.lax.rsqrt(jnp.maximum(jnp.sum(xr * xr, axis=1, keepdims=True), 1e-24))
    xcn = xc * jax.lax.rsqrt(jnp.maximum(jnp.sum(xc * xc, axis=1, keepdims=True), 1e-24))
    logits = jnp.einsum("md,nd->mn",
                        xrn.astype(jnp.bfloat16), xcn.astype(jnp.bfloat16),
                        preferred_element_type=jnp.float32) / temp
    # logits bounded by 1/temp -> plain exp is numerically safe (== softmax(dim=1))
    e = jnp.exp(logits)
    l_ref[...] += jnp.sum(e, axis=1, keepdims=True)
    acc_ref[...] += jnp.dot(e, xc, preferred_element_type=jnp.float32)

    @pl.when(k == pl.num_programs(1) - 1)
    def _():
        x_neg = acc_ref[...] / l_ref[...]
        y = xr - scale * x_neg                     # identity=False, positive=False
        mu = jnp.mean(y, axis=1, keepdims=True)
        var = jnp.mean((y - mu) ** 2, axis=1, keepdims=True)
        o_ref[...] = (y - mu) * jax.lax.rsqrt(var + 1e-6)   # LayerNorm eps=1e-6


def contranorm(x, scale=0.1, temp=0.8):
    n, d = x.shape
    tm = _tile(n, _NN_TILE)
    tk = _tile(n, _NN_TILE)
    return pl.pallas_call(
        functools.partial(_contranorm_kernel, scale=scale, temp=temp),
        out_shape=jax.ShapeDtypeStruct((n, d), jnp.float32),
        grid=(n // tm, n // tk),
        in_specs=[
            pl.BlockSpec((tm, d), lambda i, k: (i, 0)),
            pl.BlockSpec((tk, d), lambda i, k: (k, 0)),
        ],
        out_specs=pl.BlockSpec((tm, d), lambda i, k: (i, 0)),
        scratch_shapes=[pltpu.VMEM((tm, 1), jnp.float32),
                        pltpu.VMEM((tm, d), jnp.float32)],
        compiler_params=_cparams(("parallel", "arbitrary")),
    )(x, x)


def _contrast_pair_kernel(z1_ref, z2_ref, pos_ref, post_ref, o_ref,
                          rowsum, rowpos, colsum, colpos, acc12,
                          *, tau, n_total, n_col_tiles):
    i = pl.program_id(0)
    j = pl.program_id(1)
    ni = pl.num_programs(0)
    nj = pl.num_programs(1)

    z1 = z1_ref[...]
    z2 = z2_ref[...]
    z1n = z1 * jax.lax.rsqrt(jnp.maximum(jnp.sum(z1 * z1, axis=1, keepdims=True), 1e-24))
    z2n = z2 * jax.lax.rsqrt(jnp.maximum(jnp.sum(z2 * z2, axis=1, keepdims=True), 1e-24))
    sim = jnp.exp(
        jnp.einsum("md,nd->mn",
                   z1n.astype(jnp.bfloat16), z2n.astype(jnp.bfloat16),
                   preferred_element_type=jnp.float32) / tau)       # (tm, tn)
    p_ij = pos_ref[...].astype(jnp.float32)                         # pos[i, j] block
    p_ji = post_ref[...].astype(jnp.float32)                        # pos[j, i] block (pos.T)

    @pl.when(jnp.logical_and(i == 0, j == 0))
    def _():
        acc12[...] = jnp.zeros_like(acc12)

    # ---- z1 -> z2 direction: per-row accumulation over column tiles ----
    @pl.when(j == 0)
    def _():
        rowsum[...] = jnp.zeros_like(rowsum)
        rowpos[...] = jnp.zeros_like(rowpos)

    rowsum[...] += jnp.sum(sim, axis=1, keepdims=True)
    rowpos[...] += jnp.sum(sim * p_ij, axis=1, keepdims=True)

    # ---- z2 -> z1 direction: column reductions of the SAME sim block ----
    col_s = jnp.sum(sim, axis=0, keepdims=True)                     # (1, tn)
    col_p = jnp.sum(sim * p_ji, axis=0, keepdims=True)              # (1, tn)

    @pl.when(i == 0)
    def _():
        colsum[j] = col_s
        colpos[j] = col_p

    @pl.when(i > 0)
    def _():
        colsum[j] = colsum[j] + col_s
        colpos[j] = colpos[j] + col_p

    @pl.when(j == nj - 1)
    def _():
        ratio = rowpos[...] / (rowsum[...] + 1e-8)
        acc12[...] += jnp.sum(jnp.log(ratio), axis=0, keepdims=True)

    @pl.when(jnp.logical_and(i == ni - 1, j == nj - 1))
    def _():
        def body(jj, carry):
            lg = jnp.log(colpos[jj] / (colsum[jj] + 1e-8))          # (1, tn)
            return carry + jnp.sum(lg, axis=1, keepdims=True)
        tot21 = jax.lax.fori_loop(0, n_col_tiles, body,
                                  jnp.zeros((1, 1), jnp.float32))
        o_ref[:, 0:1] = -acc12[...] * (1.0 / n_total)
        o_ref[:, 1:2] = -tot21 * (1.0 / n_total)


def contrast_pair(z1p, z2p, pos_b, post_b, tau):
    """HeCo InfoNCE pair loss: returns (loss_1to2, loss_2to1)."""
    n, d = z1p.shape
    tm = _tile(n, _NN_TILE)
    tn = _tile(n, _NN_TILE)
    n_col_tiles = n // tn
    out = pl.pallas_call(
        functools.partial(_contrast_pair_kernel, tau=tau,
                          n_total=float(n), n_col_tiles=n_col_tiles),
        out_shape=jax.ShapeDtypeStruct((1, 2), jnp.float32),
        grid=(n // tm, n // tn),
        in_specs=[
            pl.BlockSpec((tm, d), lambda i, j: (i, 0)),
            pl.BlockSpec((tn, d), lambda i, j: (j, 0)),
            pl.BlockSpec((tm, tn), lambda i, j: (i, j)),
            pl.BlockSpec((tm, tn), lambda i, j: (i, j)),
        ],
        out_specs=pl.BlockSpec((1, 2), lambda i, j: (0, 0)),
        scratch_shapes=[
            pltpu.VMEM((tm, 1), jnp.float32),
            pltpu.VMEM((tm, 1), jnp.float32),
            pltpu.VMEM((n_col_tiles, 1, tn), jnp.float32),
            pltpu.VMEM((n_col_tiles, 1, tn), jnp.float32),
            pltpu.VMEM((1, 1), jnp.float32),
        ],
        compiler_params=_cparams(("arbitrary", "arbitrary")),
    )(z1p, z2p, pos_b, post_b)
    return out[0, 0], out[0, 1]


# ---------------------------------------------------------------------------
# Glue: semantic attention, parameter init, full forward
# ---------------------------------------------------------------------------

def semantic_attention(embeds, fc_w, fc_b, att_vec):
    """HeCo `Attention` / inter_att: tanh(fc(emb)).mean(0) . att -> softmax."""
    scores = []
    for e in embeds:
        sp = jnp.mean(linear_act(e, fc_w, fc_b, act="tanh"), axis=0)   # (D,)
        scores.append(jnp.sum(att_vec[0] * sp))
    beta = jax.nn.softmax(jnp.stack(scores))
    z = beta[0] * embeds[0]
    for i in range(1, len(embeds)):
        z = z + beta[i] * embeds[i]
    return z


def xavier_normal(key, fan_in, fan_out, shape, gain=1.414):
    std = gain * math.sqrt(2.0 / (fan_in + fan_out))
    return std * jax.random.normal(key, shape, dtype=jnp.float32)


def init_params(key, hidden_dim, feats_dim_list, P, nei_num):
    keys = iter(jax.random.split(key, 64))
    p = {}
    p["fc_w"] = [xavier_normal(next(keys), d, hidden_dim, (d, hidden_dim))
                 for d in feats_dim_list]
    p["fc_b"] = [jnp.zeros((hidden_dim,), jnp.float32) for _ in feats_dim_list]
    p["mp_gcn_w"] = [xavier_normal(next(keys), hidden_dim, hidden_dim,
                                   (hidden_dim, hidden_dim), gain=1.0) for _ in range(P)]
    p["mp_gcn_b"] = [jnp.zeros((hidden_dim,), jnp.float32) for _ in range(P)]
    p["mp_att_fc_w"] = xavier_normal(next(keys), hidden_dim, hidden_dim,
                                     (hidden_dim, hidden_dim))
    p["mp_att_fc_b"] = jnp.zeros((hidden_dim,), jnp.float32)
    p["mp_att_vec"] = xavier_normal(next(keys), hidden_dim, 1, (1, hidden_dim))
    p["ng_intra_att"] = [xavier_normal(next(keys), 2 * hidden_dim, 1, (1, 2 * hidden_dim))
                         for _ in range(nei_num)]
    p["ng_inter_fc_w"] = xavier_normal(next(keys), hidden_dim, hidden_dim,
                                       (hidden_dim, hidden_dim))
    p["ng_inter_fc_b"] = jnp.zeros((hidden_dim,), jnp.float32)
    p["ng_inter_vec"] = xavier_normal(next(keys), hidden_dim, 1, (1, hidden_dim))
    p["proj_w1"] = xavier_normal(next(keys), hidden_dim, hidden_dim, (hidden_dim, hidden_dim))
    p["proj_b1"] = jnp.zeros((hidden_dim,), jnp.float32)
    p["proj_w2"] = xavier_normal(next(keys), hidden_dim, hidden_dim, (hidden_dim, hidden_dim))
    p["proj_b2"] = jnp.zeros((hidden_dim,), jnp.float32)
    return p


def triview_hcl_forward(params, cfg, feats, pos, mps, nei_index):
    P, nei_num = cfg["P"], cfg["nei_num"]
    tau, lam, num_layers = cfg["tau"], cfg["lam"], cfg["num_layers"]

    # cast the big N x N streams once: bf16 HBM traffic, f32 MXU accumulation
    mps_b = [m.astype(jnp.bfloat16) for m in mps]
    pos_b = pos.astype(jnp.bfloat16)
    post_b = pos.T.astype(jnp.bfloat16)      # pos[j, i] blocks for the reverse direction

    # 1) per-type feature projection: ELU(feat_drop(Linear(x)))  (drop = identity)
    h_all = [linear_act(feats[i], params["fc_w"][i], params["fc_b"][i], act="elu")
             for i in range(len(feats))]

    # 2) Mp_encoder: per-metapath GCN + semantic attention
    mp_embeds = [gcn(mps_b[p], h_all[0], params["mp_gcn_w"][p], params["mp_gcn_b"][p])
                 for p in range(P)]
    z_mp = semantic_attention(mp_embeds, params["mp_att_fc_w"],
                              params["mp_att_fc_b"], params["mp_att_vec"])

    # 3) Ng_encoder: intra-type neighbor attention + inter-type attention
    # TODO(synk): gather kept as a single XLA gather in (N, S, D) layout; an
    #             in-kernel scalar-prefetch/DMA row gather would remove it.
    intra_embeds = []
    for i in range(nei_num):
        nei_emb = jnp.take(h_all[i + 1], nei_index[i], axis=0)        # (N, S, D)
        intra_embeds.append(intra_att(nei_emb, h_all[0], params["ng_intra_att"][i]))
    z_ng = semantic_attention(intra_embeds, params["ng_inter_fc_w"],
                              params["ng_inter_fc_b"], params["ng_inter_vec"])

    # 4) Sm_encoder: SGC-style propagation over averaged meta-path adjacency
    if num_layers == 0:
        z_sm = h_all[0]
    else:
        z_sm, adj_sm_b = sm_first_layer(mps_b, h_all[0])   # mean(mps) fused in-kernel
        for _ in range(num_layers - 1):
            z_sm = propagate(adj_sm_b, z_sm)

    # 5) ContraNorm on the neighbor-view embedding
    z_ng = contranorm(z_ng, scale=0.1, temp=0.8)

    # 6) Contrast loss between the three views (fused projection head)
    def do_proj(z):
        return proj_head(z, params["proj_w1"], params["proj_b1"],
                         params["proj_w2"], params["proj_b2"])

    zp_mp, zp_ng, zp_sm = do_proj(z_mp), do_proj(z_ng), do_proj(z_sm)
    a12, a21 = contrast_pair(zp_mp, zp_ng, pos_b, post_b, tau)
    b12, b21 = contrast_pair(zp_mp, zp_sm, pos_b, post_b, tau)
    loss = (lam * 0.5 * (a12 + a21) + (1.0 - lam) * 0.5 * (b12 + b21))
    return loss


# ---------------------------------------------------------------------------
# Example run
# ---------------------------------------------------------------------------

if __name__ == "__main__":
    key = jax.random.PRNGKey(0)
    k_param, k_f0, k_f1, k_f2, k_a0, k_a1, k_pos, k_n0, k_n1 = jax.random.split(key, 9)

    hidden_dim = 64                    # must match ContraNorm(dim=64)
    feats_dim_list = [32, 24, 16]
    N0, N1, N2 = 16, 12, 10            # target nodes + two neighbor node types
    P = 2
    sample_rate = [3, 2]
    nei_num = 2
    cfg = dict(P=P, nei_num=nei_num, tau=0.8, lam=0.5, num_layers=2)

    params = init_params(k_param, hidden_dim, feats_dim_list, P, nei_num)

    feats = [
        jax.random.normal(k_f0, (N0, feats_dim_list[0]), jnp.float32),
        jax.random.normal(k_f1, (N1, feats_dim_list[1]), jnp.float32),
        jax.random.normal(k_f2, (N2, feats_dim_list[2]), jnp.float32),
    ]

    def make_adj(k):
        a = (jax.random.uniform(k, (N0, N0)) < 0.3).astype(jnp.float32)
        a = jnp.maximum(a, jnp.eye(N0, dtype=jnp.float32))
        return a / jnp.sum(a, axis=1, keepdims=True)          # row-normalized

    mps = [make_adj(k_a0), make_adj(k_a1)]

    pos = (jax.random.uniform(k_pos, (N0, N0)) < 0.15).astype(jnp.float32)
    pos = jnp.maximum(pos, jnp.eye(N0, dtype=jnp.float32))    # every node has >=1 positive

    nei_index = [
        jax.random.randint(k_n0, (N0, sample_rate[0]), 0, N1, dtype=jnp.int32),
        jax.random.randint(k_n1, (N0, sample_rate[1]), 0, N2, dtype=jnp.int32),
    ]

    loss = triview_hcl_forward(params, cfg, feats, pos, mps, nei_index)
    loss = jax.block_until_ready(loss)
    assert jnp.isfinite(loss), f"loss not finite: {loss}"
    print("KERNEL_OK")
</pallas_src>

<mosaic_0001>
module attributes {stable_mosaic.version = 11 : i64} {
  func.func @_linear_act_kernel(%arg0: i32, %arg1: memref<16x32xf32, #tpu.memory_space<vmem>>, %arg2: memref<32x64xf32, #tpu.memory_space<vmem>>, %arg3: memref<1x64xf32, #tpu.memory_space<vmem>>, %arg4: memref<16x64xf32, #tpu.memory_space<vmem>>) attributes {dimension_semantics = [#tpu.dimension_semantics<parallel>], iteration_bounds = array<i64: 1>, scalar_prefetch = 0 : i64, scratch_operands = 0 : i64, tpu.core_type = #tpu.core_type<tc>, window_params = [{transform_indices = @transform_0, window_bounds = array<i64: 16, 32>}, {pipeline_mode = #tpu.pipeline_mode<synchronous>, transform_indices = @transform_1, window_bounds = array<i64: 32, 64>}, {pipeline_mode = #tpu.pipeline_mode<synchronous>, transform_indices = @transform_2, window_bounds = array<i64: 1, 64>}, {transform_indices = @transform_3, window_bounds = array<i64: 16, 64>}]} {
    %c0 = arith.constant 0 : index
    %c0_0 = arith.constant 0 : index
    %0 = vector.load %arg1[%c0, %c0_0] : memref<16x32xf32, #tpu.memory_space<vmem>>, vector<16x32xf32>
    %c0_1 = arith.constant 0 : index
    %c0_2 = arith.constant 0 : index
    %1 = vector.load %arg2[%c0_1, %c0_2] : memref<32x64xf32, #tpu.memory_space<vmem>>, vector<32x64xf32>
    %cst = arith.constant dense<0.000000e+00> : vector<16x64xf32>
    %2 = tpu.matmul %0, %1, %cst {dimension_numbers = #tpu.dot_dimension_numbers<[1], [0], [0], [1], [0, 0, 1, 1], [], []>} : vector<16x32xf32>, vector<32x64xf32>, vector<16x64xf32> -> vector<16x64xf32>
    %c0_3 = arith.constant 0 : index
    %c0_4 = arith.constant 0 : index
    %3 = vector.load %arg3[%c0_3, %c0_4] : memref<1x64xf32, #tpu.memory_space<vmem>>, vector<1x64xf32>
    %4 = vector.broadcast %3 : vector<1x64xf32> to vector<16x64xf32>
    %5 = arith.addf %2, %4 : vector<16x64xf32>
    %cst_5 = arith.constant 0.000000e+00 : f32
    %6 = vector.broadcast %cst_5 : f32 to vector<16x64xf32>
    %7 = arith.cmpf ogt, %5, %6 : vector<16x64xf32>
    %cst_6 = arith.constant 0.000000e+00 : f32
    %8 = vector.broadcast %cst_6 : f32 to vector<16x64xf32>
    %9 = arith.minimumf %5, %8 : vector<16x64xf32>
    %10 = math.exp %9 : vector<16x64xf32>
    %cst_7 = arith.constant 1.000000e+00 : f32
    %11 = vector.broadcast %cst_7 : f32 to vector<16x64xf32>
    %12 = arith.subf %10, %11 : vector<16x64xf32>
    %13 = arith.select %7, %5, %12 : vector<16x64xi1>, vector<16x64xf32>
    %c0_8 = arith.constant 0 : index
    %c0_9 = arith.constant 0 : index
    %14 = vector.load %arg4[%c0_8, %c0_9] : memref<16x64xf32, #tpu.memory_space<vmem>>, vector<16x64xf32>
    tpu.vector_store %arg4[%c0_8, %c0_9], %13 {strides = array<i32>} : memref<16x64xf32, #tpu.memory_space<vmem>>, vector<16x64xf32>,
    return
  }
  func.func @transform_0(%arg0: i32) -> (i32, i32) {
    %c0_i32 = arith.constant 0 : i32
    %c0_i32_0 = arith.constant 0 : i32
    return %arg0, %c0_i32 : i32, i32
  }
  func.func @transform_1(%arg0: i32) -> (i32, i32) {
    %c0_i32 = arith.constant 0 : i32
    %c0_i32_0 = arith.constant 0 : i32
    %c0_i32_1 = arith.constant 0 : i32
    return %c0_i32, %c0_i32_0 : i32, i32
  }
  func.func @transform_2(%arg0: i32) -> (i32, i32) {
    %c0_i32 = arith.constant 0 : i32
    %c0_i32_0 = arith.constant 0 : i32
    %c0_i32_1 = arith.constant 0 : i32
    return %c0_i32, %c0_i32_0 : i32, i32
  }
  func.func @transform_3(%arg0: i32) -> (i32, i32) {
    %c0_i32 = arith.constant 0 : i32
    %c0_i32_0 = arith.constant 0 : i32
    return %arg0, %c0_i32 : i32, i32
  }
}

</mosaic_0001>

<llo_original>
// kernel: tpu_custom_call.1
$region0: #{tpu_custom_call.1}
  #allocation0 [shape = 'u32[]', space=smem, size = 0x4, offset = 0x4, fixed_abs, tag = 'smem constant byte address 0x4 - core index']
  #allocation1 [shape = 'u32[144,128]{1,0:T(1,128)}', space=vmem, size = 0x12000, scoped, tag = 'internal scratch']
  %s0 = inlined_call_operand.hbm [shape: f32[16,32], index: 0, kind: input, shape index: {}]
  %s1 = inlined_call_operand.hbm [shape: f32[32,64], index: 1, kind: input, shape index: {}]
  %s2 = inlined_call_operand.vmem [shape: f32[1,64], index: 2, kind: input, shape index: {}]
  %s3 = inlined_call_operand.hbm [shape: f32[16,64], index: 3, kind: output, shape index: {}]
  %s4 = sld [smem:[#allocation0]]
  $region30: #{tpu_custom_call.1} parent=0
    _
  %s6 = ssub.s32 1, %s4
  %s7 = scalar_select 0, %s6, %s4
  $region1: #{tpu_custom_call.1} parent=0
    #allocation2 [shape = 'u8[8192]{0}', space=vmem, size = 0x2000, scoped, tag = 'input window, operand 0, single buffered']
    #allocation3 [shape = 's32[1]{0}', space=sflag, size = 0x4, scoped, tag = 'scoped memory for tpu_custom_call.1']
    #allocation4 [shape = 's32[1]{0}', space=sflag, size = 0x4, scoped, tag = 'scoped memory for tpu_custom_call.1']
    #allocation5 [shape = 'u8[16384]{0}', space=vmem, size = 0x4000, scoped, tag = 'input window, operand 1, single buffered']
    #allocation6 [shape = 's32[1]{0}', space=sflag, size = 0x4, scoped, tag = 'scoped memory for tpu_custom_call.1']
    #allocation7 [shape = 'u8[8192]{0}', space=vmem, size = 0x2000, scoped, tag = 'output window, operand 0, single buffered']
    %8 = vsyncpa [#allocation3], 0
    %9 = vsyncpa [#allocation6], 0
    %10 = vsyncpa [#allocation4], 0
    // Predicated region
    $region2: #{tpu_custom_call.1} parent=1 // pred_check
      _
    $region3: #{tpu_custom_call.1} parent=1 // pred_check_branch
      %12 = sbr.rel (0) target = $region5
    $region4: #{tpu_custom_call.1} parent=1 // pred_region
      %s14 = ssub.s32 256, 256
      %15 = vsyncadd [#allocation3], %s14
      %s16 = sshll.u32 [#allocation2], 4
      %s17 = int_to_ptr.vmem [resolvable:$true] %s16
      %22 = dma.hbm_to_vmem [thread:$0]  %s0, 256, %s17, [#allocation3], 128, 128, 8
    $region5: #{tpu_custom_call.1} parent=1 // pred_fallthru
      _
    // Predicated region
    $region6: #{tpu_custom_call.1} parent=1 // pred_check
      _
    $region7: #{tpu_custom_call.1} parent=1 // pred_check_branch
      %24 = sbr.rel (0) target = $region9
    $region8: #{tpu_custom_call.1} parent=1 // pred_region
      %s26 = ssub.s32 512, 512
      %27 = vsyncadd [#allocation6], %s26
      %s28 = sshll.u32 [#allocation5], 4
      %s29 = int_to_ptr.vmem [resolvable:$true] %s28
      %34 = dma.hbm_to_vmem [thread:$0]  %s1, 512, %s29, [#allocation6], 128, 128, 8
    $region9: #{tpu_custom_call.1} parent=1 // pred_fallthru
      _
    // Predicated region
    $region10: #{tpu_custom_call.1} parent=1 // pred_check
      _
    $region11: #{tpu_custom_call.1} parent=1 // pred_check_branch
      %36 = sbr.rel (0) target = $region13
    $region12: #{tpu_custom_call.1} parent=1 // pred_region
      _
    $region13: #{tpu_custom_call.1} parent=1 // pred_fallthru
      _
    // Predicated region
    $region14: #{tpu_custom_call.1} parent=1 // pred_check
      _
    $region15: #{tpu_custom_call.1} parent=1 // pred_check_branch
      %38 = sbr.rel (0) target = $region17
    $region16: #{tpu_custom_call.1} parent=1 // pred_region
      %39 = dma.done [#allocation3], 256
    $region17: #{tpu_custom_call.1} parent=1 // pred_fallthru
      _
    // Predicated region
    $region18: #{tpu_custom_call.1} parent=1 // pred_check
      _
    $region19: #{tpu_custom_call.1} parent=1 // pred_check_branch
      %41 = sbr.rel (0) target = $region21
    $region20: #{tpu_custom_call.1} parent=1 // pred_region
      %42 = dma.done [#allocation6], 512
    $region21: #{tpu_custom_call.1} parent=1 // pred_fallthru
      _
    %v43 = vld [vmem:[#allocation2] sm:$0xff]
    %v44 = vld [vmem:[#allocation2 + $0x8] sm:$0xff]
    %v45 = vld [vmem:[#allocation5] sm:$0xff]
    %v46 = vld [vmem:[#allocation5 + $0x8] sm:$0xff]
    %v47 = vld [vmem:[#allocation5 + $0x10] sm:$0xff]
    %v48 = vld [vmem:[#allocation5 + $0x18] sm:$0xff]
    %v49 = vld [vmem:[%s2] sm:$0x1]
    %v51 = vlaneseq
    %v52 = vshrl.u32 %v51, 7
    %v53 = vsub.s32 0, %v52
    %v54 = vrot.slane %v49, %v53
    %vm56 = vcmask 261120
    %v58 = vsel %vm56, %v43, 0
    %v61 = vsel %vm56, %v44, 0
    %63 = vmatprep.subr.mxu0 0.0
    %64 = vmatpush1.msra.mxu0 %v45
    %65 = vmatprep.subr.mxu0 0.0
    %66 = vmatpush1.msra.mxu0 %v46
    %67 = vmatprep.subr.mxu0 0.0
    %68 = vmatpush1.msra.mxu0 %v47
    %69 = vmatprep.subr.mxu0 0.0
    %70 = vmatpush1.msra.mxu0 %v48
    %71 = vmatprep.subr.mxu0 0.0
    %72 = vmatpush1.msra.mxu0 0.0
    %73 = vmatprep.subr.mxu0 0.0
    %74 = vmatpush1.msra.mxu0 0.0
    %75 = vmatprep.subr.mxu0 0.0
    %76 = vmatpush1.msra.mxu0 0.0
    %77 = vmatprep.subr.mxu0 0.0
    %78 = vmatpush1.msra.mxu0 0.0
    %79 = vmatprep.subr.mxu0 0.0
    %80 = vmatpush1.msra.mxu0 0.0
    %81 = vmatprep.subr.mxu0 0.0
    %82 = vmatpush1.msra.mxu0 0.0
    %83 = vmatprep.subr.mxu0 0.0
    %84 = vmatpush1.msra.mxu0 0.0
    %85 = vmatprep.subr.mxu0 0.0
    %86 = vmatpush1.msra.mxu0 0.0
    %87 = vmatprep.subr.mxu0 0.0
    %88 = vmatpush1.msra.mxu0 0.0
    %89 = vmatprep.subr.mxu0 0.0
    %90 = vmatpush1.msra.mxu0 0.0
    %91 = vmatprep.subr.mxu0 0.0
    %92 = vmatpush1.msra.mxu0 0.0
    %93 = vmatprep.subr.mxu0 0.0
    %94 = vmatpush1.msra.mxu0 0.0
    %95 = vmatprep.subr.mxu0 0.0
    %96 = vmatpush1.msra.mxu0 0.0
    %97 = vmatprep.subr.mxu0 0.0
    %98 = vmatpush1.msra.mxu0 0.0
    %99 = vmatprep.subr.mxu0 0.0
    %100 = vmatpush1.msra.mxu0 0.0
    %101 = vmatprep.subr.mxu0 0.0
    %102 = vmatpush1.msra.mxu0 0.0
    %103 = vmatprep.subr.mxu0 0.0
    %104 = vmatpush1.msra.mxu0 0.0
    %105 = vmatprep.subr.mxu0 0.0
    %106 = vmatpush1.msra.mxu0 0.0
    %107 = vmatprep.subr.mxu0 0.0
    %108 = vmatpush1.msra.mxu0 0.0
    %109 = vmatprep.subr.mxu0 0.0
    %110 = vmatpush1.msra.mxu0 0.0
    %111 = vmatprep.subr.mxu0 0.0
    %112 = vmatpush1.msra.mxu0 0.0
    %113 = vmatprep.subr.mxu0 0.0
    %114 = vmatpush1.msra.mxu0 0.0
    %115 = vmatprep.subr.mxu0 0.0
    %116 = vmatpush1.msra.mxu0 0.0
    %117 = vmatprep.subr.mxu0 0.0
    %118 = vmatpush1.msra.mxu0 0.0
    %119 = vmatprep.subr.mxu0 0.0
    %120 = vmatpush1.msra.mxu0 0.0
    %121 = vmatprep.subr.mxu0 0.0
    %122 = vmatpush1.msra.mxu0 0.0
    %123 = vmatprep.subr.mxu0 0.0
    %124 = vmatpush1.msra.mxu0 0.0
    %125 = vmatprep.subr.mxu0 0.0
    %126 = vmatpush1.msra.mxu0 0.0
    %127 = vmatprep.mubr.f32.mxu0 0.0
    %128 = vmatmul.mubr.f32.gmra.mrb[0].mxu0 %v58
    %v129 = vpop.f32.mrb[0].mxu0
    %v130 = vadd.f32 %v54, %v129
    %v131 = vpop.f32.mrb[0].mxu0
    %132 = vmatprep.mubr.f32.mxu0 0.0
    %133 = vmatmul.mubr.f32.gmra.mrb[0].mxu0 %v61
    %v134 = vpop.f32.mrb[0].mxu0
    %v135 = vadd.f32 %v54, %v134
    %v136 = vpop.f32.mrb[0].mxu0
    %137 = vdwg.mxu0
    %vm138 = vcmp.gt.f32.partialorder %v130, 0.0
    %vm139 = vcmp.gt.f32.partialorder %v135, 0.0
    %v140 = vmin.f32 %v130, 0.0
    %v141 = vmin.f32 %v135, 0.0
    %v142 = vmul.f32 %v140, 1.442695
    %v143 = vpow.pop %v142
    %v144 = vmul.f32 %v141, 1.442695
    %v145 = vpow.pop %v144
    %v146 = vsub.f32 %v143, 1.0
    %v147 = vsub.f32 %v145, 1.0
    %v148 = vsel %vm138, %v130, %v146
    %v149 = vsel %vm139, %v135, %v147
    %vm150 = vcmask 523264
    %151 = vst.msk [vmem:[#allocation7] sm:$0xff] %vm150, %v148
    %152 = vst.msk [vmem:[#allocation7 + $0x8] sm:$0xff] %vm150, %v149
    // Predicated region
    $region22: #{tpu_custom_call.1} parent=1 // pred_check
      _
    $region23: #{tpu_custom_call.1} parent=1 // pred_check_branch
      %154 = sbr.rel (0) target = $region25
    $region24: #{tpu_custom_call.1} parent=1 // pred_region
      %s156 = ssub.s32 256, 256
      %157 = vsyncadd [#allocation4], %s156
      %s158 = sshll.u32 [#allocation7], 4
      %s159 = int_to_ptr.vmem [resolvable:$true] %s158
      %164 = dma.vmem_to_hbm [thread:$0]  %s159, 256, %s3, [#allocation4], 128, 128, 8
    $region25: #{tpu_custom_call.1} parent=1 // pred_fallthru
      _
    // Predicated region
    $region26: #{tpu_custom_call.1} parent=1 // pred_check
      _
    $region27: #{tpu_custom_call.1} parent=1 // pred_check_branch
      %166 = sbr.rel (0) target = $region29
    $region28: #{tpu_custom_call.1} parent=1 // pred_region
      %167 = dma.done [#allocation4], 256
    $region29: #{tpu_custom_call.1} parent=1 // pred_fallthru
      _
    %168 = vsyncpa [#allocation3], 1
    %169 = vsyncpa [#allocation6], 1
    %170 = vsyncpa [#allocation4], 1

</llo_original>
